<compile_context>
chip_gen: v6e
topology: v6e:2x2x1
jax: 0.10.0
libtpu: 0.0.40
codegen_flags: <defaults>
</compile_context>

<pallas_src>
import jax
import jax.numpy as jnp
from jax import lax
from jax.experimental import pallas as pl
from jax.experimental.pallas import tpu as pltpu


D_IN, D_H1, D_H2, D_OUT = 270, 128, 64, 2


def _round_up(n, m):
    return ((n + m - 1) // m) * m


def mlp_kernel(x_ref, w1_ref, b1_ref, w2_ref, b2_ref, w3t_ref, b3t_ref, o_ref):
    # x streams in as f32; cast to bf16 in VMEM (hides under the x DMA).
    x = x_ref[...].astype(jnp.bfloat16)                                  # [tb, 270]
    # TODO(synk): on v7x (256-wide MXU) layer 1 runs at ~26% MXU utilization
    # (K=270 pads to 512, N=128 of 256); if bundle counts confirm MXU-bound,
    # compute h1^T = W1^T @ x^T so the batch fills the lane/N axis.
    h1 = jnp.dot(x, w1_ref[...], preferred_element_type=jnp.float32) + b1_ref[...]
    h1 = jnp.maximum(h1, 0.0)                                            # [tb, 128] f32
    h2 = jnp.dot(h1.astype(jnp.bfloat16), w2_ref[...],
                 preferred_element_type=jnp.float32) + b2_ref[...]
    h2 = jnp.maximum(h2, 0.0)                                            # [tb, 64] f32
    # Layer 3 emitted transposed: out^T[2, tb] = W3^T @ h2^T, expressed as a
    # contraction over the shared 64-dim (q@k^T-style), so no explicit
    # transpose is needed and the store below is lane-dense.
    out_t = lax.dot_general(
        w3t_ref[...], h2.astype(jnp.bfloat16),
        dimension_numbers=(((1,), (1,)), ((), ())),
        preferred_element_type=jnp.float32) + b3t_ref[...]               # [2, tb]
    o_ref[...] = out_t.astype(o_ref.dtype)


def _vmem_capacity():
    try:
        return int(pltpu.get_tpu_info().vmem_capacity_bytes)
    except Exception:
        return 64 << 20          # be conservative (v7x-sized) if unavailable


def _default_tb():
    # 8192 on 128 MiB-VMEM chips (v5e/v6e), 4096 on 64 MiB (v7x).
    return 8192 if _vmem_capacity() >= (96 << 20) else 4096


def _vmem_limit_bytes(tb):
    """VMEM budget with lane/sublane padding, capped below device capacity."""
    lanes_in = _round_up(D_IN, 128)       # 270 -> 384 lanes
    lanes_h1 = _round_up(D_H1, 128)       # 128
    lanes_h2 = _round_up(D_H2, 128)       # 64 -> 128 lanes
    sub_out = _round_up(D_OUT, 8)         # 2 -> 8 sublanes

    x_bytes = 2 * tb * lanes_in * 4                      # double-buffered f32 x tile
    out_bytes = 2 * sub_out * tb * 4                     # double-buffered f32 [2, tb] tile
    w_bytes = 2 * 2 * (_round_up(D_IN, 16) * lanes_h1    # W1 (bf16, dbl-buffered)
                       + _round_up(D_H1, 16) * lanes_h2  # W2
                       + _round_up(D_OUT, 16) * lanes_h2)  # W3^T
    b_bytes = 2 * 3 * (8 * 128 * 4)                      # biases pad to (8,128) f32
    tmp_bytes = (tb * lanes_in * 2                       # bf16 copy of x
                 + tb * lanes_h1 * (4 + 2)               # h1 f32 + bf16
                 + tb * lanes_h2 * (4 + 2)               # h2 f32 + bf16
                 + sub_out * tb * 4)                     # out^T f32 before store
    need = int(1.4 * (x_bytes + out_bytes + w_bytes + b_bytes + tmp_bytes)) + (4 << 20)
    return max(32 << 20, min(need, _vmem_capacity() * 3 // 4))


def simple_mlp(x, params, *, tb=None):
    """x: [B, 270] float32 -> [B, 2] float32 (bf16 MXU matmuls, f32 accumulation)."""
    w1, b1, w2, b2, w3, b3 = params
    B = x.shape[0]

    if tb is None:
        tb = _default_tb()
    tb = max(256, _round_up(tb, 256))

    # Tile selection: single sublane-padded tile for small batches; split into
    # two >=256-row tiles once B >= 512 so the v7x megacore has work on both
    # TensorCores; otherwise stream fixed tb-row tiles.
    Bp8 = _round_up(max(B, 1), 8)
    if Bp8 <= tb:
        tb_eff = _round_up(pl.cdiv(Bp8, 2), 256) if B >= 512 else Bp8
    else:
        tb_eff = tb
    Bp = _round_up(max(B, 1), tb_eff)
    grid = (Bp // tb_eff,)

    # x stays f32 and unpadded (no wrapper-side cast/pad pass over HBM): the
    # kernel casts to bf16 in VMEM and the partial last block relies on Pallas
    # boundary handling.  Weight/bias casts are tiny one-time ops.
    x32 = x.astype(jnp.float32)
    w1b, w2b = w1.astype(jnp.bfloat16), w2.astype(jnp.bfloat16)
    w3t = w3.T.astype(jnp.bfloat16)                       # [2, 64]
    b1f, b2f = b1.astype(jnp.float32), b2.astype(jnp.float32)
    b3t = b3.reshape(D_OUT, 1).astype(jnp.float32)        # [2, 1]

    def whole(shape):                                     # resident-in-VMEM spec
        return pl.BlockSpec(shape, lambda *_: (0,) * len(shape))

    out_t = pl.pallas_call(
        mlp_kernel,
        out_shape=jax.ShapeDtypeStruct((D_OUT, Bp), jnp.float32),
        grid_spec=pltpu.PrefetchScalarGridSpec(
            num_scalar_prefetch=0,
            grid=grid,
            in_specs=[
                # Streamed f32 x tile.  If the x DMA is still exposed at large
                # tb, add pipeline_mode=pl.Buffered(3) to this spec only.
                pl.BlockSpec((tb_eff, D_IN), lambda i: (i, 0)),
                whole((D_IN, D_H1)),     # W1   (resident)
                whole((1, D_H1)),        # b1
                whole((D_H1, D_H2)),     # W2
                whole((1, D_H2)),        # b2
                whole((D_OUT, D_H2)),    # W3^T
                whole((D_OUT, 1)),       # b3^T
            ],
            # Lane-dense output: last dim is the batch tile (a multiple of 128
            # or the whole padded batch) -> unmasked full-lane stores.
            out_specs=pl.BlockSpec((D_OUT, tb_eff), lambda i: (0, i)),
        ),
        compiler_params=pltpu.CompilerParams(
            dimension_semantics=("parallel",),     # megacore-shard batch tiles
            vmem_limit_bytes=_vmem_limit_bytes(tb_eff),
        ),
    )(x32, w1b, b1f, w2b, b2f, w3t, b3t)

    return out_t[:, :B].T                                  # [B, 2] f32


def init_params(key):
    """Deterministic init mimicking nn.Linear default (uniform(-1/sqrt(fan_in), +))."""
    def linear(k, fan_in, fan_out):
        kw, kb = jax.random.split(k)
        bound = 1.0 / jnp.sqrt(fan_in)
        # stored as [in, out] == PyTorch weight transposed
        w = jax.random.uniform(kw, (fan_in, fan_out), jnp.float32, -bound, bound)
        b = jax.random.uniform(kb, (1, fan_out), jnp.float32, -bound, bound)
        return w, b

    k1, k2, k3 = jax.random.split(key, 3)
    w1, b1 = linear(k1, D_IN, D_H1)
    w2, b2 = linear(k2, D_H1, D_H2)
    w3, b3 = linear(k3, D_H2, D_OUT)
    return (w1, b1, w2, b2, w3, b3)


def reference_f32(x, params):
    w1, b1, w2, b2, w3, b3 = params
    h = jnp.maximum(x @ w1 + b1, 0.0)
    h = jnp.maximum(h @ w2 + b2, 0.0)
    return h @ w3 + b3


def reference_bf16(x, params):
    """Same bf16-operand / f32-accumulate numerics as the kernel."""
    w1, b1, w2, b2, w3, b3 = params
    xb = x.astype(jnp.bfloat16)
    h = jnp.dot(xb, w1.astype(jnp.bfloat16), preferred_element_type=jnp.float32) + b1
    h = jnp.maximum(h, 0.0)
    h = jnp.dot(h.astype(jnp.bfloat16), w2.astype(jnp.bfloat16),
                preferred_element_type=jnp.float32) + b2
    h = jnp.maximum(h, 0.0)
    return jnp.dot(h.astype(jnp.bfloat16), w3.astype(jnp.bfloat16),
                   preferred_element_type=jnp.float32) + b3


if __name__ == "__main__":
    key = jax.random.PRNGKey(0)
    kp, kx1, kx2 = jax.random.split(key, 3)
    params = init_params(kp)

    # Small smoke test (single tile, no boundary padding needed).
    B = 8
    x = jax.random.normal(kx1, (B, D_IN), jnp.float32)
    out = jax.block_until_ready(simple_mlp(x, params))
    assert out.shape == (B, D_OUT)
    assert jnp.allclose(out, reference_bf16(x, params), atol=1e-3, rtol=1e-3), \
        "mismatch vs bf16 reference (B=8)"
    assert jnp.allclose(out, reference_f32(x, params), atol=5e-2, rtol=5e-2), \
        "mismatch vs f32 reference (B=8)"

    # Exercise the 2-tile megacore path with a partial last block:
    # B=600 -> tile 512, grid=(2,), last block has 88 valid rows (verifies
    # Pallas boundary handling keeps garbage rows out of out[:B]).
    B2 = 600
    x2 = jax.random.normal(kx2, (B2, D_IN), jnp.float32)
    out2 = jax.block_until_ready(simple_mlp(x2, params))
    assert out2.shape == (B2, D_OUT)
    assert jnp.allclose(out2, reference_bf16(x2, params), atol=1e-3, rtol=1e-3), \
        "mismatch vs bf16 reference (B=600)"
    assert jnp.allclose(out2, reference_f32(x2, params), atol=5e-2, rtol=5e-2), \
        "mismatch vs f32 reference (B=600)"

    print("KERNEL_OK")
</pallas_src>

<mosaic_0001>
module attributes {stable_mosaic.version = 11 : i64} {
  func.func @mlp_kernel(%arg0: i32, %arg1: memref<8x270xf32, #tpu.memory_space<vmem>>, %arg2: memref<270x128xbf16, #tpu.memory_space<vmem>>, %arg3: memref<1x128xf32, #tpu.memory_space<vmem>>, %arg4: memref<128x64xbf16, #tpu.memory_space<vmem>>, %arg5: memref<1x64xf32, #tpu.memory_space<vmem>>, %arg6: memref<2x64xbf16, #tpu.memory_space<vmem>>, %arg7: memref<2x1xf32, #tpu.memory_space<vmem>>, %arg8: memref<2x8xf32, #tpu.memory_space<vmem>>) attributes {dimension_semantics = [#tpu.dimension_semantics<parallel>], iteration_bounds = array<i64: 1>, scalar_prefetch = 0 : i64, scratch_operands = 0 : i64, tpu.core_type = #tpu.core_type<tc>, window_params = [{transform_indices = @transform_0, window_bounds = array<i64: 8, 270>}, {pipeline_mode = #tpu.pipeline_mode<synchronous>, transform_indices = @transform_1, window_bounds = array<i64: 270, 128>}, {pipeline_mode = #tpu.pipeline_mode<synchronous>, transform_indices = @transform_2, window_bounds = array<i64: 1, 128>}, {pipeline_mode = #tpu.pipeline_mode<synchronous>, transform_indices = @transform_3, window_bounds = array<i64: 128, 64>}, {pipeline_mode = #tpu.pipeline_mode<synchronous>, transform_indices = @transform_4, window_bounds = array<i64: 1, 64>}, {pipeline_mode = #tpu.pipeline_mode<synchronous>, transform_indices = @transform_5, window_bounds = array<i64: 2, 64>}, {pipeline_mode = #tpu.pipeline_mode<synchronous>, transform_indices = @transform_6, window_bounds = array<i64: 2, 1>}, {transform_indices = @transform_7, window_bounds = array<i64: 2, 8>}]} {
    %c0 = arith.constant 0 : index
    %c0_0 = arith.constant 0 : index
    %0 = vector.load %arg1[%c0, %c0_0] : memref<8x270xf32, #tpu.memory_space<vmem>>, vector<8x270xf32>
    %1 = arith.truncf %0 : vector<8x270xf32> to vector<8x270xbf16>
    %c0_1 = arith.constant 0 : index
    %c0_2 = arith.constant 0 : index
    %2 = vector.load %arg2[%c0_1, %c0_2] : memref<270x128xbf16, #tpu.memory_space<vmem>>, vector<270x128xbf16>
    %cst = arith.constant dense<0.000000e+00> : vector<8x128xf32>
    %3 = tpu.matmul %1, %2, %cst {dimension_numbers = #tpu.dot_dimension_numbers<[1], [0], [0], [1], [0, 0, 1, 1], [], []>} : vector<8x270xbf16>, vector<270x128xbf16>, vector<8x128xf32> -> vector<8x128xf32>
    %c0_3 = arith.constant 0 : index
    %c0_4 = arith.constant 0 : index
    %4 = vector.load %arg3[%c0_3, %c0_4] : memref<1x128xf32, #tpu.memory_space<vmem>>, vector<1x128xf32>
    %5 = vector.broadcast %4 : vector<1x128xf32> to vector<8x128xf32>
    %6 = arith.addf %3, %5 : vector<8x128xf32>
    %cst_5 = arith.constant 0.000000e+00 : f32
    %7 = vector.broadcast %cst_5 : f32 to vector<8x128xf32>
    %8 = arith.maximumf %6, %7 : vector<8x128xf32>
    %9 = arith.truncf %8 : vector<8x128xf32> to vector<8x128xbf16>
    %c0_6 = arith.constant 0 : index
    %c0_7 = arith.constant 0 : index
    %10 = vector.load %arg4[%c0_6, %c0_7] : memref<128x64xbf16, #tpu.memory_space<vmem>>, vector<128x64xbf16>
    %cst_8 = arith.constant dense<0.000000e+00> : vector<8x64xf32>
    %11 = tpu.matmul %9, %10, %cst_8 {dimension_numbers = #tpu.dot_dimension_numbers<[1], [0], [0], [1], [0, 0, 1, 1], [], []>} : vector<8x128xbf16>, vector<128x64xbf16>, vector<8x64xf32> -> vector<8x64xf32>
    %c0_9 = arith.constant 0 : index
    %c0_10 = arith.constant 0 : index
    %12 = vector.load %arg5[%c0_9, %c0_10] : memref<1x64xf32, #tpu.memory_space<vmem>>, vector<1x64xf32>
    %13 = vector.broadcast %12 : vector<1x64xf32> to vector<8x64xf32>
    %14 = arith.addf %11, %13 : vector<8x64xf32>
    %cst_11 = arith.constant 0.000000e+00 : f32
    %15 = vector.broadcast %cst_11 : f32 to vector<8x64xf32>
    %16 = arith.maximumf %14, %15 : vector<8x64xf32>
    %c0_12 = arith.constant 0 : index
    %c0_13 = arith.constant 0 : index
    %17 = vector.load %arg6[%c0_12, %c0_13] : memref<2x64xbf16, #tpu.memory_space<vmem>>, vector<2x64xbf16>
    %18 = arith.truncf %16 : vector<8x64xf32> to vector<8x64xbf16>
    %cst_14 = arith.constant dense<0.000000e+00> : vector<2x8xf32>
    %19 = tpu.matmul %17, %18, %cst_14 {dimension_numbers = #tpu.dot_dimension_numbers<[1], [1], [0], [0], [0, 0, 1, 0], [], []>} : vector<2x64xbf16>, vector<8x64xbf16>, vector<2x8xf32> -> vector<2x8xf32>
    %c0_15 = arith.constant 0 : index
    %c0_16 = arith.constant 0 : index
    %20 = vector.load %arg7[%c0_15, %c0_16] : memref<2x1xf32, #tpu.memory_space<vmem>>, vector<2x1xf32>
    %21 = vector.broadcast %20 : vector<2x1xf32> to vector<2x8xf32>
    %22 = arith.addf %19, %21 : vector<2x8xf32>
    %c0_17 = arith.constant 0 : index
    %c0_18 = arith.constant 0 : index
    %23 = vector.load %arg8[%c0_17, %c0_18] : memref<2x8xf32, #tpu.memory_space<vmem>>, vector<2x8xf32>
    tpu.vector_store %arg8[%c0_17, %c0_18], %22 {strides = array<i32>} : memref<2x8xf32, #tpu.memory_space<vmem>>, vector<2x8xf32>,
    return
  }
  func.func @transform_0(%arg0: i32) -> (i32, i32) {
    %c0_i32 = arith.constant 0 : i32
    %c0_i32_0 = arith.constant 0 : i32
    return %arg0, %c0_i32 : i32, i32
  }
  func.func @transform_1(%arg0: i32) -> (i32, i32) {
    %c0_i32 = arith.constant 0 : i32
    %c0_i32_0 = arith.constant 0 : i32
    %c0_i32_1 = arith.constant 0 : i32
    return %c0_i32, %c0_i32_0 : i32, i32
  }
  func.func @transform_2(%arg0: i32) -> (i32, i32) {
    %c0_i32 = arith.constant 0 : i32
    %c0_i32_0 = arith.constant 0 : i32
    %c0_i32_1 = arith.constant 0 : i32
    return %c0_i32, %c0_i32_0 : i32, i32
  }
  func.func @transform_3(%arg0: i32) -> (i32, i32) {
    %c0_i32 = arith.constant 0 : i32
    %c0_i32_0 = arith.constant 0 : i32
    %c0_i32_1 = arith.constant 0 : i32
    return %c0_i32, %c0_i32_0 : i32, i32
  }
  func.func @transform_4(%arg0: i32) -> (i32, i32) {
    %c0_i32 = arith.constant 0 : i32
    %c0_i32_0 = arith.constant 0 : i32
    %c0_i32_1 = arith.constant 0 : i32
    return %c0_i32, %c0_i32_0 : i32, i32
  }
  func.func @transform_5(%arg0: i32) -> (i32, i32) {
    %c0_i32 = arith.constant 0 : i32
    %c0_i32_0 = arith.constant 0 : i32
    %c0_i32_1 = arith.constant 0 : i32
    return %c0_i32, %c0_i32_0 : i32, i32
  }
  func.func @transform_6(%arg0: i32) -> (i32, i32) {
    %c0_i32 = arith.constant 0 : i32
    %c0_i32_0 = arith.constant 0 : i32
    %c0_i32_1 = arith.constant 0 : i32
    return %c0_i32, %c0_i32_0 : i32, i32
  }
  func.func @transform_7(%arg0: i32) -> (i32, i32) {
    %c0_i32 = arith.constant 0 : i32
    %c0_i32_0 = arith.constant 0 : i32
    return %c0_i32, %arg0 : i32, i32
  }
}

</mosaic_0001>

<llo_original>
// kernel: tpu_custom_call.1
$region0: #{tpu_custom_call.1}
  #allocation0 [shape = 'u32[]', space=smem, size = 0x4, offset = 0x4, fixed_abs, tag = 'smem constant byte address 0x4 - core index']
  #allocation1 [shape = 'u32[144,128]{1,0:T(1,128)}', space=vmem, size = 0x12000, scoped, tag = 'internal scratch']
  %s0 = inlined_call_operand.vmem [shape: f32[8,270], index: 0, kind: input, shape index: {}]
  %s1 = inlined_call_operand.hbm [shape: bf16[270,128], index: 1, kind: input, shape index: {}]
  %s2 = inlined_call_operand.vmem [shape: f32[1,128], index: 2, kind: input, shape index: {}]
  %s3 = inlined_call_operand.vmem [shape: bf16[128,64], index: 3, kind: input, shape index: {}]
  %s4 = inlined_call_operand.vmem [shape: f32[1,64], index: 4, kind: input, shape index: {}]
  %s5 = inlined_call_operand.vmem [shape: bf16[2,64], index: 5, kind: input, shape index: {}]
  %s6 = inlined_call_operand.vmem [shape: f32[2,1], index: 6, kind: input, shape index: {}]
  %s7 = inlined_call_operand.hbm [shape: f32[2,8], index: 7, kind: output, shape index: {}]
  %s8 = sld [smem:[#allocation0]]
  $region42: #{tpu_custom_call.1} parent=0
    _
  %s10 = ssub.s32 1, %s8
  %s11 = scalar_select 0, %s10, %s8
  $region1: #{tpu_custom_call.1} parent=0
    #allocation2 [shape = 'u8[69632]{0}', space=vmem, size = 0x11000, scoped, tag = 'input window, operand 1, single buffered']
    #allocation3 [shape = 's32[1]{0}', space=sflag, size = 0x4, scoped, tag = 'scoped memory for tpu_custom_call.1']
    #allocation4 [shape = 's32[1]{0}', space=sflag, size = 0x4, scoped, tag = 'scoped memory for tpu_custom_call.1']
    #allocation5 [shape = 'u8[1024]{0}', space=vmem, size = 0x400, scoped, tag = 'output window, operand 0, single buffered']
    %12 = vsyncpa [#allocation3], 0
    %13 = vsyncpa [#allocation4], 0
    // Predicated region
    $region2: #{tpu_custom_call.1} parent=1 // pred_check
      _
    $region3: #{tpu_custom_call.1} parent=1 // pred_check_branch
      %15 = sbr.rel (0) target = $region5
    $region4: #{tpu_custom_call.1} parent=1 // pred_region
      _
    $region5: #{tpu_custom_call.1} parent=1 // pred_fallthru
      _
    // Predicated region
    $region6: #{tpu_custom_call.1} parent=1 // pred_check
      _
    $region7: #{tpu_custom_call.1} parent=1 // pred_check_branch
      %17 = sbr.rel (0) target = $region9
    $region8: #{tpu_custom_call.1} parent=1 // pred_region
      %s19 = ssub.s32 2176, 2176
      %20 = vsyncadd [#allocation3], %s19
      %s21 = sshll.u32 [#allocation2], 4
      %s22 = int_to_ptr.vmem [resolvable:$true] %s21
      %27 = dma.hbm_to_vmem [thread:$0]  %s1, 2176, %s22, [#allocation3], 64, 64, 4
    $region9: #{tpu_custom_call.1} parent=1 // pred_fallthru
      _
    // Predicated region
    $region10: #{tpu_custom_call.1} parent=1 // pred_check
      _
    $region11: #{tpu_custom_call.1} parent=1 // pred_check_branch
      %29 = sbr.rel (0) target = $region13
    $region12: #{tpu_custom_call.1} parent=1 // pred_region
      _
    $region13: #{tpu_custom_call.1} parent=1 // pred_fallthru
      _
    // Predicated region
    $region14: #{tpu_custom_call.1} parent=1 // pred_check
      _
    $region15: #{tpu_custom_call.1} parent=1 // pred_check_branch
      %31 = sbr.rel (0) target = $region17
    $region16: #{tpu_custom_call.1} parent=1 // pred_region
      _
    $region17: #{tpu_custom_call.1} parent=1 // pred_fallthru
      _
    // Predicated region
    $region18: #{tpu_custom_call.1} parent=1 // pred_check
      _
    $region19: #{tpu_custom_call.1} parent=1 // pred_check_branch
      %33 = sbr.rel (0) target = $region21
    $region20: #{tpu_custom_call.1} parent=1 // pred_region
      _
    $region21: #{tpu_custom_call.1} parent=1 // pred_fallthru
      _
    // Predicated region
    $region22: #{tpu_custom_call.1} parent=1 // pred_check
      _
    $region23: #{tpu_custom_call.1} parent=1 // pred_check_branch
      %35 = sbr.rel (0) target = $region25
    $region24: #{tpu_custom_call.1} parent=1 // pred_region
      _
    $region25: #{tpu_custom_call.1} parent=1 // pred_fallthru
      _
    // Predicated region
    $region26: #{tpu_custom_call.1} parent=1 // pred_check
      _
    $region27: #{tpu_custom_call.1} parent=1 // pred_check_branch
      %37 = sbr.rel (0) target = $region29
    $region28: #{tpu_custom_call.1} parent=1 // pred_region
      _
    $region29: #{tpu_custom_call.1} parent=1 // pred_fallthru
      _
    // Predicated region
    $region30: #{tpu_custom_call.1} parent=1 // pred_check
      _
    $region31: #{tpu_custom_call.1} parent=1 // pred_check_branch
      %39 = sbr.rel (0) target = $region33
    $region32: #{tpu_custom_call.1} parent=1 // pred_region
      %40 = dma.done [#allocation3], 2176
    $region33: #{tpu_custom_call.1} parent=1 // pred_fallthru
      _
    %v42 = vld [vmem:[%s0] sm:$0xff]
    %v43 = vld [vmem:[%s0 + $0x8] sm:$0xff]
    %v44 = vld [vmem:[%s0 + $0x10] sm:$0xff]
    %v45 = vpack.c.bf16 %v42, %v42
    %v46 = vpack.c.bf16 %v43, %v43
    %v47 = vpack.c.bf16 %v44, %v44
    %v48 = vld [vmem:[#allocation2] sm:$0xf]
    %v49 = vld [vmem:[#allocation2 + $0x4] sm:$0xf]
    %v50 = vld [vmem:[#allocation2 + $0x8] sm:$0xf]
    %v51 = vld [vmem:[#allocation2 + $0xc] sm:$0xf]
    %v52 = vld [vmem:[#allocation2 + $0x10] sm:$0xf]
    %v53 = vld [vmem:[#allocation2 + $0x14] sm:$0xf]
    %v54 = vld [vmem:[#allocation2 + $0x18] sm:$0xf]
    %v55 = vld [vmem:[#allocation2 + $0x1c] sm:$0xf]
    %v56 = vld [vmem:[#allocation2 + $0x20] sm:$0xf]
    %v57 = vld [vmem:[#allocation2 + $0x24] sm:$0xf]
    %v58 = vld [vmem:[#allocation2 + $0x28] sm:$0xf]
    %v59 = vld [vmem:[#allocation2 + $0x2c] sm:$0xf]
    %v60 = vld [vmem:[#allocation2 + $0x30] sm:$0xf]
    %v61 = vld [vmem:[#allocation2 + $0x34] sm:$0xf]
    %v62 = vld [vmem:[#allocation2 + $0x38] sm:$0xf]
    %v63 = vld [vmem:[#allocation2 + $0x3c] sm:$0xf]
    %v64 = vld [vmem:[#allocation2 + $0x40] sm:$0xf]
    %v65 = vld [vmem:[#allocation2 + $0x44] sm:$0xf]
    %v66 = vld [vmem:[#allocation2 + $0x48] sm:$0xf]
    %v67 = vld [vmem:[#allocation2 + $0x4c] sm:$0xf]
    %v68 = vld [vmem:[#allocation2 + $0x50] sm:$0xf]
    %v69 = vld [vmem:[#allocation2 + $0x54] sm:$0xf]
    %v70 = vld [vmem:[#allocation2 + $0x58] sm:$0xf]
    %v71 = vld [vmem:[#allocation2 + $0x5c] sm:$0xf]
    %v72 = vld [vmem:[#allocation2 + $0x60] sm:$0xf]
    %v73 = vld [vmem:[#allocation2 + $0x64] sm:$0xf]
    %v74 = vld [vmem:[#allocation2 + $0x68] sm:$0xf]
    %v75 = vld [vmem:[#allocation2 + $0x6c] sm:$0xf]
    %v76 = vld [vmem:[#allocation2 + $0x70] sm:$0xf]
    %v77 = vld [vmem:[#allocation2 + $0x74] sm:$0xf]
    %v78 = vld [vmem:[#allocation2 + $0x78] sm:$0xf]
    %v79 = vld [vmem:[#allocation2 + $0x7c] sm:$0xf]
    %v80 = vld [vmem:[#allocation2 + $0x80] sm:$0xf]
    %v81 = vld [vmem:[#allocation2 + $0x84] sm:$0x7]
    %v82 = vld [vmem:[%s2] sm:$0x1]
    %v84 = vlaneseq
    %v85 = vshrl.u32 %v84, 7
    %v86 = vsub.s32 0, %v85
    %v87 = vrot.slane %v82, %v86
    %v123 = vunpack.c.l.b16 %v48
    %v124 = vunpack.c.l.b16 %v49
    %v125 = vunpack.c.l.b16 %v50
    %v126 = vunpack.c.l.b16 %v51
    %v127 = vunpack.c.l.b16 %v52
    %v128 = vunpack.c.l.b16 %v53
    %v129 = vunpack.c.l.b16 %v54
    %v130 = vunpack.c.l.b16 %v55
    %v131 = vunpack.c.l.b16 %v56
    %v132 = vunpack.c.l.b16 %v57
    %v133 = vunpack.c.l.b16 %v58
    %v134 = vunpack.c.l.b16 %v59
    %v135 = vunpack.c.l.b16 %v60
    %v136 = vunpack.c.l.b16 %v61
    %v137 = vunpack.c.l.b16 %v62
    %v138 = vunpack.c.l.b16 %v63
    %v139 = vunpack.c.l.b16 %v64
    %v140 = vunpack.c.l.b16 %v65
    %v141 = vunpack.c.l.b16 %v66
    %v142 = vunpack.c.l.b16 %v67
    %v143 = vunpack.c.l.b16 %v68
    %v144 = vunpack.c.l.b16 %v69
    %v145 = vunpack.c.l.b16 %v70
    %v146 = vunpack.c.l.b16 %v71
    %v147 = vunpack.c.l.b16 %v72
    %v148 = vunpack.c.l.b16 %v73
    %v149 = vunpack.c.l.b16 %v74
    %v150 = vunpack.c.l.b16 %v75
    %v151 = vunpack.c.l.b16 %v76
    %v152 = vunpack.c.l.b16 %v77
    %v153 = vunpack.c.l.b16 %v78
    %v154 = vunpack.c.l.b16 %v79
    %v155 = vunpack.c.l.b16 %v80
    %v156 = vunpack.c.l.b16 %v81
    %v157 = vpack.c.b16 %v124, %v123
    %v158 = vpack.c.b16 %v126, %v125
    %v159 = vpack.c.b16 %v128, %v127
    %v160 = vpack.c.b16 %v130, %v129
    %v161 = vpack.c.b16 %v132, %v131
    %v162 = vpack.c.b16 %v134, %v133
    %v163 = vpack.c.b16 %v136, %v135
    %v164 = vpack.c.b16 %v138, %v137
    %v165 = vpack.c.b16 %v140, %v139
    %v166 = vpack.c.b16 %v142, %v141
    %v167 = vpack.c.b16 %v144, %v143
    %v168 = vpack.c.b16 %v146, %v145
    %v169 = vpack.c.b16 %v148, %v147
    %v170 = vpack.c.b16 %v150, %v149
    %v171 = vpack.c.b16 %v152, %v151
    %v172 = vpack.c.b16 %v154, %v153
    %v173 = vpack.c.b16 %v156, %v155
    %vm190 = vcmask 113664
    %v192 = vsel %vm190, %v47, 0
    %vm194 = vcmask 1046528
    %v196 = vsel %vm194, %v173, 0
    %198 = vmatprep.subr.bf16.mxu0 0
    %199 = vmatpush1.bf16.msra.mxu0 %v164
    %200 = vmatprep.subr.bf16.mxu0 0
    %201 = vmatpush1.bf16.msra.mxu0 %v163
    %202 = vmatprep.subr.bf16.mxu0 0
    %203 = vmatpush1.bf16.msra.mxu0 %v162
    %204 = vmatprep.subr.bf16.mxu0 0
    %205 = vmatpush1.bf16.msra.mxu0 %v161
    %206 = vmatprep.subr.bf16.mxu0 0
    %207 = vmatpush1.bf16.msra.mxu0 %v160
    %208 = vmatprep.subr.bf16.mxu0 0
    %209 = vmatpush1.bf16.msra.mxu0 %v159
    %210 = vmatprep.subr.bf16.mxu0 0
    %211 = vmatpush1.bf16.msra.mxu0 %v158
    %212 = vmatprep.subr.bf16.mxu0 0
    %213 = vmatpush1.bf16.msra.mxu0 %v157
    %214 = vmatprep.subr.bf16.mxu0 0
    %215 = vmatpush2.bf16.msra.mxu0 %v172
    %216 = vmatprep.subr.bf16.mxu0 0
    %217 = vmatpush2.bf16.msra.mxu0 %v171
    %218 = vmatprep.subr.bf16.mxu0 0
    %219 = vmatpush2.bf16.msra.mxu0 %v170
    %220 = vmatprep.subr.bf16.mxu0 0
    %221 = vmatpush2.bf16.msra.mxu0 %v169
    %222 = vmatprep.subr.bf16.mxu0 0
    %223 = vmatpush2.bf16.msra.mxu0 %v168
    %224 = vmatprep.subr.bf16.mxu0 0
    %225 = vmatpush2.bf16.msra.mxu0 %v167
    %226 = vmatprep.subr.bf16.mxu0 0
    %227 = vmatpush2.bf16.msra.mxu0 %v166
    %228 = vmatprep.subr.bf16.mxu0 0
    %229 = vmatpush2.bf16.msra.mxu0 %v165
    %230 = vmatprep.mubr.bf16.mxu0 %v46
    %231 = vmatmul.mubr.bf16.gmra.mxu0 %v45
    %v232 = vpop.f32.mrf.mxu0
    %v233 = vadd.f32 %v87, %v232
    %v234 = vpop.f32.mrf.mxu0
    %v235 = vpop.f32.mrf.mxu0
    %v236 = vpop.f32.mrf.mxu0
    %237 = vdwg.mxu0
    %238 = vmatprep.subr.bf16.mxu0 0
    %239 = vmatpush1.bf16.msra.mxu0 0
    %240 = vmatprep.subr.bf16.mxu0 0
    %241 = vmatpush1.bf16.msra.mxu0 0
    %242 = vmatprep.subr.bf16.mxu0 0
    %243 = vmatpush1.bf16.msra.mxu0 0
    %244 = vmatprep.subr.bf16.mxu0 0
    %245 = vmatpush1.bf16.msra.mxu0 0
    %246 = vmatprep.subr.bf16.mxu0 0
    %247 = vmatpush1.bf16.msra.mxu0 0
    %248 = vmatprep.subr.bf16.mxu0 0
    %249 = vmatpush1.bf16.msra.mxu0 0
    %250 = vmatprep.subr.bf16.mxu0 0
    %251 = vmatpush1.bf16.msra.mxu0 0
    %252 = vmatprep.subr.bf16.mxu0 0
    %253 = vmatpush1.bf16.msra.mxu0 %v196
    %254 = vmatprep.subr.bf16.mxu0 0
    %255 = vmatpush2.bf16.msra.mxu0 0
    %256 = vmatprep.subr.bf16.mxu0 0
    %257 = vmatpush2.bf16.msra.mxu0 0
    %258 = vmatprep.subr.bf16.mxu0 0
    %259 = vmatpush2.bf16.msra.mxu0 0
    %260 = vmatprep.subr.bf16.mxu0 0
    %261 = vmatpush2.bf16.msra.mxu0 0
    %262 = vmatprep.subr.bf16.mxu0 0
    %263 = vmatpush2.bf16.msra.mxu0 0
    %264 = vmatprep.subr.bf16.mxu0 0
    %265 = vmatpush2.bf16.msra.mxu0 0
    %266 = vmatprep.subr.bf16.mxu0 0
    %267 = vmatpush2.bf16.msra.mxu0 0
    %268 = vmatprep.subr.bf16.mxu0 0
    %269 = vmatpush2.bf16.msra.mxu0 0
    %270 = vmatprep.mubr.bf16.mxu0 0
    %271 = vmatmul.mubr.bf16.gmra.mxu0 %v192
    %v272 = vpop.f32.mrf.mxu0
    %v273 = vadd.f32 %v233, %v272
    %v274 = vpop.f32.mrf.mxu0
    %v275 = vpop.f32.mrf.mxu0
    %v276 = vpop.f32.mrf.mxu0
    %277 = vdwg.mxu0
    %v278 = vmax.f32 %v273, 0.0
    %v279 = vpack.c.bf16 %v278, %v278
    %v280 = vld [vmem:[%s3] sm:$0xf]
    %v281 = vld [vmem:[%s3 + $0x4] sm:$0xf]
    %v282 = vld [vmem:[%s3 + $0x8] sm:$0xf]
    %v283 = vld [vmem:[%s3 + $0xc] sm:$0xf]
    %v284 = vld [vmem:[%s3 + $0x10] sm:$0xf]
    %v285 = vld [vmem:[%s3 + $0x14] sm:$0xf]
    %v286 = vld [vmem:[%s3 + $0x18] sm:$0xf]
    %v287 = vld [vmem:[%s3 + $0x1c] sm:$0xf]
    %v288 = vld [vmem:[%s3 + $0x20] sm:$0xf]
    %v289 = vld [vmem:[%s3 + $0x24] sm:$0xf]
    %v290 = vld [vmem:[%s3 + $0x28] sm:$0xf]
    %v291 = vld [vmem:[%s3 + $0x2c] sm:$0xf]
    %v292 = vld [vmem:[%s3 + $0x30] sm:$0xf]
    %v293 = vld [vmem:[%s3 + $0x34] sm:$0xf]
    %v294 = vld [vmem:[%s3 + $0x38] sm:$0xf]
    %v295 = vld [vmem:[%s3 + $0x3c] sm:$0xf]
    %v296 = vld [vmem:[%s4] sm:$0x1]
    %v298 = vlaneseq
    %v299 = vshrl.u32 %v298, 7
    %v300 = vsub.s32 0, %v299
    %v301 = vrot.slane %v296, %v300
    %v319 = vunpack.c.l.b16 %v280
    %v320 = vunpack.c.l.b16 %v281
    %v321 = vunpack.c.l.b16 %v282
    %v322 = vunpack.c.l.b16 %v283
    %v323 = vunpack.c.l.b16 %v284
    %v324 = vunpack.c.l.b16 %v285
    %v325 = vunpack.c.l.b16 %v286
    %v326 = vunpack.c.l.b16 %v287
    %v327 = vunpack.c.l.b16 %v288
    %v328 = vunpack.c.l.b16 %v289
    %v329 = vunpack.c.l.b16 %v290
    %v330 = vunpack.c.l.b16 %v291
    %v331 = vunpack.c.l.b16 %v292
    %v332 = vunpack.c.l.b16 %v293
    %v333 = vunpack.c.l.b16 %v294
    %v334 = vunpack.c.l.b16 %v295
    %v335 = vpack.c.b16 %v320, %v319
    %v336 = vpack.c.b16 %v322, %v321
    %v337 = vpack.c.b16 %v324, %v323
    %v338 = vpack.c.b16 %v326, %v325
    %v339 = vpack.c.b16 %v328, %v327
    %v340 = vpack.c.b16 %v330, %v329
    %v341 = vpack.c.b16 %v332, %v331
    %v342 = vpack.c.b16 %v334, %v333
    %351 = vmatprep.subr.bf16.mxu0 0
    %352 = vmatpush1.bf16.msra.mxu0 %v342
    %353 = vmatprep.subr.bf16.mxu0 0
    %354 = vmatpush1.bf16.msra.mxu0 %v341
    %355 = vmatprep.subr.bf16.mxu0 0
    %356 = vmatpush1.bf16.msra.mxu0 %v340
    %357 = vmatprep.subr.bf16.mxu0 0
    %358 = vmatpush1.bf16.msra.mxu0 %v339
    %359 = vmatprep.subr.bf16.mxu0 0
    %360 = vmatpush1.bf16.msra.mxu0 %v338
    %361 = vmatprep.subr.bf16.mxu0 0
    %362 = vmatpush1.bf16.msra.mxu0 %v337
    %363 = vmatprep.subr.bf16.mxu0 0
    %364 = vmatpush1.bf16.msra.mxu0 %v336
    %365 = vmatprep.subr.bf16.mxu0 0
    %366 = vmatpush1.bf16.msra.mxu0 %v335
    %367 = vmatprep.subr.bf16.mxu0 0
    %368 = vmatpush2.bf16.msra.mxu0 0
    %369 = vmatprep.subr.bf16.mxu0 0
    %370 = vmatpush2.bf16.msra.mxu0 0
    %371 = vmatprep.subr.bf16.mxu0 0
    %372 = vmatpush2.bf16.msra.mxu0 0
    %373 = vmatprep.subr.bf16.mxu0 0
    %374 = vmatpush2.bf16.msra.mxu0 0
    %375 = vmatprep.subr.bf16.mxu0 0
    %376 = vmatpush2.bf16.msra.mxu0 0
    %377 = vmatprep.subr.bf16.mxu0 0
    %378 = vmatpush2.bf16.msra.mxu0 0
    %379 = vmatprep.subr.bf16.mxu0 0
    %380 = vmatpush2.bf16.msra.mxu0 0
    %381 = vmatprep.subr.bf16.mxu0 0
    %382 = vmatpush2.bf16.msra.mxu0 0
    %383 = vmatprep.mubr.bf16.mxu0 0
    %384 = vmatmul.mubr.bf16.gmra.mxu0 %v279
    %v385 = vpop.f32.mrf.mxu0
    %v386 = vadd.f32 %v301, %v385
    %v387 = vpop.f32.mrf.mxu0
    %v388 = vpop.f32.mrf.mxu0
    %v389 = vpop.f32.mrf.mxu0
    %390 = vdwg.mxu0
    %v391 = vmax.f32 %v386, 0.0
    %v392 = vld [vmem:[%s5] sm:$0x1]
    %v393 = vpack.c.bf16 %v391, %v391
    %v394 = vld [vmem:[%s6] sm:$0x3]
    %396 = vset.pattern.permute.xlu0 0
    %397 = vperm.xlu0 %396, %v394
    %v398 = vpop.permute.xlu0 %397
    %vm400 = vcmask 523264
    %v402 = vsel %vm400, %v392, 0
    %v405 = vsel %vm400, %v393, 0
    %407 = vmatprep.subr.bf16.mxu0 0
    %408 = vmatpush1.bf16.xpose.msra.mxu0 0
    %409 = vmatprep.subr.bf16.mxu0 0
    %410 = vmatpush1.bf16.xpose.msra.mxu0 0
    %411 = vmatprep.subr.bf16.mxu0 0
    %412 = vmatpush1.bf16.xpose.msra.mxu0 0
    %413 = vmatprep.subr.bf16.mxu0 0
    %414 = vmatpush1.bf16.xpose.msra.mxu0 0
    %415 = vmatprep.subr.bf16.mxu0 0
    %416 = vmatpush1.bf16.xpose.msra.mxu0 0
    %417 = vmatprep.subr.bf16.mxu0 0
    %418 = vmatpush1.bf16.xpose.msra.mxu0 0
    %419 = vmatprep.subr.bf16.mxu0 0
    %420 = vmatpush1.bf16.xpose.msra.mxu0 0
    %421 = vmatprep.subr.bf16.mxu0 0
    %422 = vmatpush1.bf16.xpose.msra.mxu0 %v405
    %423 = vmatprep.subr.bf16.mxu0 0
    %424 = vmatpush2.bf16.xpose.msra.mxu0 0
    %425 = vmatprep.subr.bf16.mxu0 0
    %426 = vmatpush2.bf16.xpose.msra.mxu0 0
    %427 = vmatprep.subr.bf16.mxu0 0
    %428 = vmatpush2.bf16.xpose.msra.mxu0 0
    %429 = vmatprep.subr.bf16.mxu0 0
    %430 = vmatpush2.bf16.xpose.msra.mxu0 0
    %431 = vmatprep.subr.bf16.mxu0 0
    %432 = vmatpush2.bf16.xpose.msra.mxu0 0
    %433 = vmatprep.subr.bf16.mxu0 0
    %434 = vmatpush2.bf16.xpose.msra.mxu0 0
    %435 = vmatprep.subr.bf16.mxu0 0
    %436 = vmatpush2.bf16.xpose.msra.mxu0 0
    %437 = vmatprep.subr.bf16.mxu0 0
    %438 = vmatpush2.bf16.xpose.msra.mxu0 0
    %439 = vmatprep.mubr.bf16.mxu0 0
    %440 = vmatmul.mubr.bf16.gmra.mxu0 %v402
    %v441 = vpop.f32.mrf.mxu0
    %v442 = vadd.f32 %v398, %v441
    %v443 = vpop.f32.mrf.mxu0
    %v444 = vpop.f32.mrf.mxu0
    %v445 = vpop.f32.mrf.mxu0
    %446 = vdwg.mxu0
    %vm447 = vcmask 58368
    %448 = vst.msk [vmem:[#allocation5] sm:$0x3] %vm447, %v442
    // Predicated region
    $region34: #{tpu_custom_call.1} parent=1 // pred_check
      _
    $region35: #{tpu_custom_call.1} parent=1 // pred_check_branch
      %450 = sbr.rel (0) target = $region37
    $region36: #{tpu_custom_call.1} parent=1 // pred_region
      %s452 = ssub.s32 32, 32
      %453 = vsyncadd [#allocation4], %s452
      %s455 = sshll.u32 [#allocation5], 4
      %s456 = int_to_ptr.vmem [resolvable:$true] %s455
      %458 = dma.vmem_to_hbm [thread:$0]  %s456, 32, %s7, [#allocation4]
    $region37: #{tpu_custom_call.1} parent=1 // pred_fallthru
      _
    // Predicated region
    $region38: #{tpu_custom_call.1} parent=1 // pred_check
      _
    $region39: #{tpu_custom_call.1} parent=1 // pred_check_branch
      %460 = sbr.rel (0) target = $region41
    $region40: #{tpu_custom_call.1} parent=1 // pred_region
      %461 = dma.done [#allocation4], 32
    $region41: #{tpu_custom_call.1} parent=1 // pred_fallthru
      _
    %462 = vsyncpa [#allocation3], 1
    %463 = vsyncpa [#allocation4], 1

</llo_original>
